<compile_context>
chip_gen: v5e
topology: v5e:2x2
jax: 0.10.0
libtpu: 0.0.40
codegen_flags: <defaults>
</compile_context>

<pallas_src>
import jax
import jax.numpy as jnp
from jax.experimental import pallas as pl
from jax.experimental.pallas import tpu as pltpu


def _cep_lane_kernel(x_ref, w_ref, b_ref, o_ref):
    """One grid step == one tile of channels (channels on the lane dim).

    x_ref: (B, L, TC)  input tile, channels-last
    w_ref: (L, P, TC)  per-channel Linear(seq_len -> pred_len) weights (bf16)
    b_ref: (P, TC)     per-channel biases
    o_ref: (B, P, TC)  output tile, lane-dense (last dim = channels)
    """
    B, L, _tc = x_ref.shape

    x = x_ref[...]                                   # (B, L, TC)
    w = w_ref[...]                                   # (L, P, TC) bf16

    # Fold the bias add into the f32 accumulator init (hoisted broadcast).
    acc = jnp.broadcast_to(b_ref[...].astype(jnp.float32)[None, :, :],
                           o_ref.shape)              # (B, P, TC) f32

    # VPU formulation: out[b,p,c] = bias[p,c] + sum_l x[b,l,c] * w[l,p,c].
    # L == seq_len is static, so the reduction is a fully unrolled
    # broadcast-multiply-accumulate (each step: one sublane slice of x
    # broadcast over P, one (P, TC) weight slab broadcast over B).
    for l in range(L):
        xl = x[:, l, :].astype(jnp.float32)          # (B, TC)
        wl = w[l, :, :].astype(jnp.float32)          # (P, TC)
        acc = acc + xl[:, None, :] * wl[None, :, :]  # (B, P, TC)

    o_ref[...] = acc.astype(o_ref.dtype)


def _pick_channel_block(C, per_channel_bytes, vmem_budget=12 << 20):
    """Choose the channel tile width (lane dim of every block)."""
    # Small enc_in: the whole channel axis is one block (a partial lane block
    # must be a multiple of 128, so <=128 channels means "use the full dim").
    if C <= 128:
        return C
    # Multiples of 128 (lane width). Keep double-buffered blocks inside the
    # VMEM budget (sized so it also fits v7x's smaller VMEM) and keep >= 2
    # grid steps so v7x's two TensorCores both get work.
    tc = 128
    while ((tc + 128) * 2 <= C
           and 2 * (tc + 128) * per_channel_bytes <= vmem_budget):
        tc += 128
    return tc


def pack_forecaster_params(w_cpl, b_cp, weight_dtype=jnp.bfloat16):
    """Pack per-channel Linear params (done once, outside the hot path).

    w_cpl: (C, P, L)  PyTorch nn.Linear weight layout per channel
    b_cp:  (C, P)     PyTorch nn.Linear bias per channel
    returns w_lpc: (L, P, C) in `weight_dtype`, b_pc: (P, C) f32
    """
    w_lpc = jnp.transpose(w_cpl, (2, 1, 0)).astype(weight_dtype)
    b_pc = jnp.transpose(b_cp, (1, 0)).astype(jnp.float32)
    return w_lpc, b_pc


def cep_forward(batch_x, batch_x_mark, batch_y, batch_y_mark, w_lpc, b_pc,
                *, channel_block=None):
    """Forward of `net` for stage != 'test'.

    batch_x: (B, L, C)   (batch, seq_len, enc_in)
    w_lpc:   (L, P, C)   pre-packed per-channel forecaster weights
    b_pc:    (P, C)      pre-packed per-channel forecaster biases
    returns: (B, P, C)   (batch, pred_len, enc_in), dtype == batch_x.dtype
    """
    # batch_x_mark / batch_y / batch_y_mark are accepted for interface parity;
    # the per-channel Linear forecaster (enc_in=1) ignores them.
    del batch_x_mark, batch_y, batch_y_mark

    B, L, C = batch_x.shape
    Lw, P, Cw = w_lpc.shape
    assert (Lw, Cw) == (L, C), (w_lpc.shape, batch_x.shape)
    assert b_pc.shape == (P, C), b_pc.shape

    x_item = jnp.dtype(batch_x.dtype).itemsize
    w_item = jnp.dtype(w_lpc.dtype).itemsize
    b_item = jnp.dtype(b_pc.dtype).itemsize
    per_channel_bytes = (B * L * x_item + L * P * w_item + P * b_item
                         + B * P * x_item)

    tc = channel_block if channel_block is not None else _pick_channel_block(
        C, per_channel_bytes)
    grid = (pl.cdiv(C, tc),)

    # Explicit VMEM budget: ~3x one step's blocks (double-buffering + slack),
    # clamped to the 32 MiB scoped default so it also behaves on v7x.
    vmem_limit = int(min(max(4 << 20, 3 * tc * per_channel_bytes), 32 << 20))

    return pl.pallas_call(
        _cep_lane_kernel,
        out_shape=jax.ShapeDtypeStruct((B, P, C), batch_x.dtype),
        grid_spec=pltpu.PrefetchScalarGridSpec(
            num_scalar_prefetch=0,
            grid=grid,
            in_specs=[
                pl.BlockSpec((B, L, tc), lambda c: (0, 0, c)),
                pl.BlockSpec((L, P, tc), lambda c: (0, 0, c)),
                pl.BlockSpec((P, tc), lambda c: (0, c)),
            ],
            out_specs=pl.BlockSpec((B, P, tc), lambda c: (0, 0, c)),
        ),
        compiler_params=pltpu.CompilerParams(
            dimension_semantics=("parallel",),
            vmem_limit_bytes=vmem_limit,
        ),
    )(batch_x, w_lpc, b_pc)


if __name__ == "__main__":
    # small shapes consistent with the module:
    # batch=2, seq_len=8, pred_len=4, enc_in=4, time-mark features=3
    B, L, P, C, M = 2, 8, 4, 4, 3

    key = jax.random.PRNGKey(0)
    kx, kxm, ky, kym, kw, kb = jax.random.split(key, 6)

    batch_x = jax.random.normal(kx, (B, L, C), dtype=jnp.float32)
    batch_x_mark = jax.random.normal(kxm, (B, L, M), dtype=jnp.float32)
    batch_y = jax.random.normal(ky, (B, P, C), dtype=jnp.float32)
    batch_y_mark = jax.random.normal(kym, (B, P, M), dtype=jnp.float32)

    # Deterministic per-channel forecaster parameters (pool[c][0] for each c),
    # in the canonical PyTorch Linear layout, then packed once for the kernel.
    w_cpl = jax.random.normal(kw, (C, P, L), dtype=jnp.float32) * 0.1
    b_cp = jax.random.normal(kb, (C, P), dtype=jnp.float32) * 0.01
    w_lpc, b_pc = pack_forecaster_params(w_cpl, b_cp)   # bf16 weights

    out = cep_forward(batch_x, batch_x_mark, batch_y, batch_y_mark,
                      w_lpc, b_pc)
    out = jax.block_until_ready(out)
    assert out.shape == (B, P, C), out.shape

    # pure-JAX reference (same per-channel Linear semantics, same bf16 weights)
    ref = (jnp.einsum("blc,lpc->bpc", batch_x, w_lpc.astype(jnp.float32))
           + b_pc.astype(jnp.float32)[None, :, :])
    assert jnp.allclose(out, ref, atol=1e-5, rtol=1e-5), \
        float(jnp.max(jnp.abs(out - ref)))

    print("KERNEL_OK")
</pallas_src>

<mosaic_0001>
module attributes {stable_mosaic.version = 11 : i64} {
  func.func @_cep_lane_kernel(%arg0: i32, %arg1: memref<2x8x4xf32, #tpu.memory_space<vmem>>, %arg2: memref<8x4x4xbf16, #tpu.memory_space<vmem>>, %arg3: memref<4x4xf32, #tpu.memory_space<vmem>>, %arg4: memref<2x4x4xf32, #tpu.memory_space<vmem>>) attributes {dimension_semantics = [#tpu.dimension_semantics<parallel>], iteration_bounds = array<i64: 1>, scalar_prefetch = 0 : i64, scratch_operands = 0 : i64, tpu.core_type = #tpu.core_type<tc>, window_params = [{transform_indices = @transform_0, window_bounds = array<i64: 2, 8, 4>}, {transform_indices = @transform_1, window_bounds = array<i64: 8, 4, 4>}, {transform_indices = @transform_2, window_bounds = array<i64: 4, 4>}, {transform_indices = @transform_3, window_bounds = array<i64: 2, 4, 4>}]} {
    %c0 = arith.constant 0 : index
    %c0_0 = arith.constant 0 : index
    %c0_1 = arith.constant 0 : index
    %0 = vector.load %arg1[%c0, %c0_0, %c0_1] : memref<2x8x4xf32, #tpu.memory_space<vmem>>, vector<2x8x4xf32>
    %c0_2 = arith.constant 0 : index
    %c0_3 = arith.constant 0 : index
    %c0_4 = arith.constant 0 : index
    %1 = vector.load %arg2[%c0_2, %c0_3, %c0_4] : memref<8x4x4xbf16, #tpu.memory_space<vmem>>, vector<8x4x4xbf16>
    %c0_5 = arith.constant 0 : index
    %c0_6 = arith.constant 0 : index
    %2 = vector.load %arg3[%c0_5, %c0_6] : memref<4x4xf32, #tpu.memory_space<vmem>>, vector<4x4xf32>
    %3 = vector.shape_cast %2 : vector<4x4xf32> to vector<1x4x4xf32>
    %4 = vector.shape_cast %3 : vector<1x4x4xf32> to vector<1x4x4xf32>
    %5 = vector.broadcast %4 : vector<1x4x4xf32> to vector<2x4x4xf32>
    %6 = vector.extract_strided_slice %0 {offsets = [0, 0, 0], sizes = [2, 1, 4], strides = [1, 1, 1]} : vector<2x8x4xf32> to vector<2x1x4xf32>
    %7 = vector.shape_cast %6 : vector<2x1x4xf32> to vector<2x4xf32>
    %8 = vector.extract_strided_slice %1 {offsets = [0, 0, 0], sizes = [1, 4, 4], strides = [1, 1, 1]} : vector<8x4x4xbf16> to vector<1x4x4xbf16>
    %9 = vector.shape_cast %8 : vector<1x4x4xbf16> to vector<4x4xbf16>
    %10 = arith.extf %9 : vector<4x4xbf16> to vector<4x4xf32>
    %11 = vector.shape_cast %7 : vector<2x4xf32> to vector<2x1x4xf32>
    %12 = vector.shape_cast %10 : vector<4x4xf32> to vector<1x4x4xf32>
    %13 = vector.broadcast %11 : vector<2x1x4xf32> to vector<2x4x4xf32>
    %14 = vector.broadcast %12 : vector<1x4x4xf32> to vector<2x4x4xf32>
    %15 = arith.mulf %13, %14 : vector<2x4x4xf32>
    %16 = arith.addf %5, %15 : vector<2x4x4xf32>
    %17 = vector.extract_strided_slice %0 {offsets = [0, 1, 0], sizes = [2, 1, 4], strides = [1, 1, 1]} : vector<2x8x4xf32> to vector<2x1x4xf32>
    %18 = vector.shape_cast %17 : vector<2x1x4xf32> to vector<2x4xf32>
    %19 = vector.extract_strided_slice %1 {offsets = [1, 0, 0], sizes = [1, 4, 4], strides = [1, 1, 1]} : vector<8x4x4xbf16> to vector<1x4x4xbf16>
    %20 = vector.shape_cast %19 : vector<1x4x4xbf16> to vector<4x4xbf16>
    %21 = arith.extf %20 : vector<4x4xbf16> to vector<4x4xf32>
    %22 = vector.shape_cast %18 : vector<2x4xf32> to vector<2x1x4xf32>
    %23 = vector.shape_cast %21 : vector<4x4xf32> to vector<1x4x4xf32>
    %24 = vector.broadcast %22 : vector<2x1x4xf32> to vector<2x4x4xf32>
    %25 = vector.broadcast %23 : vector<1x4x4xf32> to vector<2x4x4xf32>
    %26 = arith.mulf %24, %25 : vector<2x4x4xf32>
    %27 = arith.addf %16, %26 : vector<2x4x4xf32>
    %28 = vector.extract_strided_slice %0 {offsets = [0, 2, 0], sizes = [2, 1, 4], strides = [1, 1, 1]} : vector<2x8x4xf32> to vector<2x1x4xf32>
    %29 = vector.shape_cast %28 : vector<2x1x4xf32> to vector<2x4xf32>
    %30 = vector.extract_strided_slice %1 {offsets = [2, 0, 0], sizes = [1, 4, 4], strides = [1, 1, 1]} : vector<8x4x4xbf16> to vector<1x4x4xbf16>
    %31 = vector.shape_cast %30 : vector<1x4x4xbf16> to vector<4x4xbf16>
    %32 = arith.extf %31 : vector<4x4xbf16> to vector<4x4xf32>
    %33 = vector.shape_cast %29 : vector<2x4xf32> to vector<2x1x4xf32>
    %34 = vector.shape_cast %32 : vector<4x4xf32> to vector<1x4x4xf32>
    %35 = vector.broadcast %33 : vector<2x1x4xf32> to vector<2x4x4xf32>
    %36 = vector.broadcast %34 : vector<1x4x4xf32> to vector<2x4x4xf32>
    %37 = arith.mulf %35, %36 : vector<2x4x4xf32>
    %38 = arith.addf %27, %37 : vector<2x4x4xf32>
    %39 = vector.extract_strided_slice %0 {offsets = [0, 3, 0], sizes = [2, 1, 4], strides = [1, 1, 1]} : vector<2x8x4xf32> to vector<2x1x4xf32>
    %40 = vector.shape_cast %39 : vector<2x1x4xf32> to vector<2x4xf32>
    %41 = vector.extract_strided_slice %1 {offsets = [3, 0, 0], sizes = [1, 4, 4], strides = [1, 1, 1]} : vector<8x4x4xbf16> to vector<1x4x4xbf16>
    %42 = vector.shape_cast %41 : vector<1x4x4xbf16> to vector<4x4xbf16>
    %43 = arith.extf %42 : vector<4x4xbf16> to vector<4x4xf32>
    %44 = vector.shape_cast %40 : vector<2x4xf32> to vector<2x1x4xf32>
    %45 = vector.shape_cast %43 : vector<4x4xf32> to vector<1x4x4xf32>
    %46 = vector.broadcast %44 : vector<2x1x4xf32> to vector<2x4x4xf32>
    %47 = vector.broadcast %45 : vector<1x4x4xf32> to vector<2x4x4xf32>
    %48 = arith.mulf %46, %47 : vector<2x4x4xf32>
    %49 = arith.addf %38, %48 : vector<2x4x4xf32>
    %50 = vector.extract_strided_slice %0 {offsets = [0, 4, 0], sizes = [2, 1, 4], strides = [1, 1, 1]} : vector<2x8x4xf32> to vector<2x1x4xf32>
    %51 = vector.shape_cast %50 : vector<2x1x4xf32> to vector<2x4xf32>
    %52 = vector.extract_strided_slice %1 {offsets = [4, 0, 0], sizes = [1, 4, 4], strides = [1, 1, 1]} : vector<8x4x4xbf16> to vector<1x4x4xbf16>
    %53 = vector.shape_cast %52 : vector<1x4x4xbf16> to vector<4x4xbf16>
    %54 = arith.extf %53 : vector<4x4xbf16> to vector<4x4xf32>
    %55 = vector.shape_cast %51 : vector<2x4xf32> to vector<2x1x4xf32>
    %56 = vector.shape_cast %54 : vector<4x4xf32> to vector<1x4x4xf32>
    %57 = vector.broadcast %55 : vector<2x1x4xf32> to vector<2x4x4xf32>
    %58 = vector.broadcast %56 : vector<1x4x4xf32> to vector<2x4x4xf32>
    %59 = arith.mulf %57, %58 : vector<2x4x4xf32>
    %60 = arith.addf %49, %59 : vector<2x4x4xf32>
    %61 = vector.extract_strided_slice %0 {offsets = [0, 5, 0], sizes = [2, 1, 4], strides = [1, 1, 1]} : vector<2x8x4xf32> to vector<2x1x4xf32>
    %62 = vector.shape_cast %61 : vector<2x1x4xf32> to vector<2x4xf32>
    %63 = vector.extract_strided_slice %1 {offsets = [5, 0, 0], sizes = [1, 4, 4], strides = [1, 1, 1]} : vector<8x4x4xbf16> to vector<1x4x4xbf16>
    %64 = vector.shape_cast %63 : vector<1x4x4xbf16> to vector<4x4xbf16>
    %65 = arith.extf %64 : vector<4x4xbf16> to vector<4x4xf32>
    %66 = vector.shape_cast %62 : vector<2x4xf32> to vector<2x1x4xf32>
    %67 = vector.shape_cast %65 : vector<4x4xf32> to vector<1x4x4xf32>
    %68 = vector.broadcast %66 : vector<2x1x4xf32> to vector<2x4x4xf32>
    %69 = vector.broadcast %67 : vector<1x4x4xf32> to vector<2x4x4xf32>
    %70 = arith.mulf %68, %69 : vector<2x4x4xf32>
    %71 = arith.addf %60, %70 : vector<2x4x4xf32>
    %72 = vector.extract_strided_slice %0 {offsets = [0, 6, 0], sizes = [2, 1, 4], strides = [1, 1, 1]} : vector<2x8x4xf32> to vector<2x1x4xf32>
    %73 = vector.shape_cast %72 : vector<2x1x4xf32> to vector<2x4xf32>
    %74 = vector.extract_strided_slice %1 {offsets = [6, 0, 0], sizes = [1, 4, 4], strides = [1, 1, 1]} : vector<8x4x4xbf16> to vector<1x4x4xbf16>
    %75 = vector.shape_cast %74 : vector<1x4x4xbf16> to vector<4x4xbf16>
    %76 = arith.extf %75 : vector<4x4xbf16> to vector<4x4xf32>
    %77 = vector.shape_cast %73 : vector<2x4xf32> to vector<2x1x4xf32>
    %78 = vector.shape_cast %76 : vector<4x4xf32> to vector<1x4x4xf32>
    %79 = vector.broadcast %77 : vector<2x1x4xf32> to vector<2x4x4xf32>
    %80 = vector.broadcast %78 : vector<1x4x4xf32> to vector<2x4x4xf32>
    %81 = arith.mulf %79, %80 : vector<2x4x4xf32>
    %82 = arith.addf %71, %81 : vector<2x4x4xf32>
    %83 = vector.extract_strided_slice %0 {offsets = [0, 7, 0], sizes = [2, 1, 4], strides = [1, 1, 1]} : vector<2x8x4xf32> to vector<2x1x4xf32>
    %84 = vector.shape_cast %83 : vector<2x1x4xf32> to vector<2x4xf32>
    %85 = vector.extract_strided_slice %1 {offsets = [7, 0, 0], sizes = [1, 4, 4], strides = [1, 1, 1]} : vector<8x4x4xbf16> to vector<1x4x4xbf16>
    %86 = vector.shape_cast %85 : vector<1x4x4xbf16> to vector<4x4xbf16>
    %87 = arith.extf %86 : vector<4x4xbf16> to vector<4x4xf32>
    %88 = vector.shape_cast %84 : vector<2x4xf32> to vector<2x1x4xf32>
    %89 = vector.shape_cast %87 : vector<4x4xf32> to vector<1x4x4xf32>
    %90 = vector.broadcast %88 : vector<2x1x4xf32> to vector<2x4x4xf32>
    %91 = vector.broadcast %89 : vector<1x4x4xf32> to vector<2x4x4xf32>
    %92 = arith.mulf %90, %91 : vector<2x4x4xf32>
    %93 = arith.addf %82, %92 : vector<2x4x4xf32>
    %c0_7 = arith.constant 0 : index
    %c0_8 = arith.constant 0 : index
    %c0_9 = arith.constant 0 : index
    %94 = vector.load %arg4[%c0_7, %c0_8, %c0_9] : memref<2x4x4xf32, #tpu.memory_space<vmem>>, vector<2x4x4xf32>
    tpu.vector_store %arg4[%c0_7, %c0_8, %c0_9], %93 {strides = array<i32>} : memref<2x4x4xf32, #tpu.memory_space<vmem>>, vector<2x4x4xf32>,
    return
  }
  func.func @transform_0(%arg0: i32) -> (i32, i32, i32) {
    %c0_i32 = arith.constant 0 : i32
    %c0_i32_0 = arith.constant 0 : i32
    %c0_i32_1 = arith.constant 0 : i32
    return %c0_i32, %c0_i32_0, %arg0 : i32, i32, i32
  }
  func.func @transform_1(%arg0: i32) -> (i32, i32, i32) {
    %c0_i32 = arith.constant 0 : i32
    %c0_i32_0 = arith.constant 0 : i32
    %c0_i32_1 = arith.constant 0 : i32
    return %c0_i32, %c0_i32_0, %arg0 : i32, i32, i32
  }
  func.func @transform_2(%arg0: i32) -> (i32, i32) {
    %c0_i32 = arith.constant 0 : i32
    %c0_i32_0 = arith.constant 0 : i32
    return %c0_i32, %arg0 : i32, i32
  }
  func.func @transform_3(%arg0: i32) -> (i32, i32, i32) {
    %c0_i32 = arith.constant 0 : i32
    %c0_i32_0 = arith.constant 0 : i32
    %c0_i32_1 = arith.constant 0 : i32
    return %c0_i32, %c0_i32_0, %arg0 : i32, i32, i32
  }
}

</mosaic_0001>

<llo_original>
// kernel: tpu_custom_call.1
$region0: #{tpu_custom_call.1}
  #allocation0 [shape = 'u32[]', space=smem, size = 0x4, offset = 0x4, fixed_abs, tag = 'smem constant byte address 0x4 - core index']
  #allocation1 [shape = 'u32[72,128]{1,0:T(1,128)}', space=vmem, size = 0x9000, scoped, tag = 'internal scratch']
  %s0 = inlined_call_operand.vmem [shape: f32[2,8,4], index: 0, kind: input, shape index: {}]
  %s1 = inlined_call_operand.vmem [shape: bf16[8,4,4], index: 1, kind: input, shape index: {}]
  %s2 = inlined_call_operand.vmem [shape: f32[4,4], index: 2, kind: input, shape index: {}]
  %s3 = inlined_call_operand.hbm [shape: f32[2,4,4], index: 3, kind: output, shape index: {}]
  %s4 = sld [smem:[#allocation0]]
  $region22: #{tpu_custom_call.1} parent=0
    _
  %s6 = ssub.s32 1, %s4
  %s7 = scalar_select 0, %s6, %s4
  $region1: #{tpu_custom_call.1} parent=0
    #allocation2 [shape = 'u8[4096]{0}', space=vmem, size = 0x1000, scoped, tag = 'output window, operand 0, single buffered']
    #allocation3 [shape = 's32[1]{0}', space=sflag, size = 0x4, scoped, tag = 'scoped memory for tpu_custom_call.1']
    %8 = vsyncpa [#allocation3], 0
    // Predicated region
    $region2: #{tpu_custom_call.1} parent=1 // pred_check
      _
    $region3: #{tpu_custom_call.1} parent=1 // pred_check_branch
      %10 = sbr.rel (0) target = $region5
    $region4: #{tpu_custom_call.1} parent=1 // pred_region
      _
    $region5: #{tpu_custom_call.1} parent=1 // pred_fallthru
      _
    // Predicated region
    $region6: #{tpu_custom_call.1} parent=1 // pred_check
      _
    $region7: #{tpu_custom_call.1} parent=1 // pred_check_branch
      %12 = sbr.rel (0) target = $region9
    $region8: #{tpu_custom_call.1} parent=1 // pred_region
      _
    $region9: #{tpu_custom_call.1} parent=1 // pred_fallthru
      _
    // Predicated region
    $region10: #{tpu_custom_call.1} parent=1 // pred_check
      _
    $region11: #{tpu_custom_call.1} parent=1 // pred_check_branch
      %14 = sbr.rel (0) target = $region13
    $region12: #{tpu_custom_call.1} parent=1 // pred_region
      _
    $region13: #{tpu_custom_call.1} parent=1 // pred_fallthru
      _
    %v15 = vld [vmem:[%s0] sm:$0xff]
    %v16 = vld [vmem:[%s0 + $0x8] sm:$0xff]
    %v17 = vld [vmem:[%s1] sm:$0x3]
    %v18 = vld [vmem:[%s1 + $0x2] sm:$0x3]
    %v19 = vld [vmem:[%s1 + $0x4] sm:$0x3]
    %v20 = vld [vmem:[%s1 + $0x6] sm:$0x3]
    %v21 = vld [vmem:[%s1 + $0x8] sm:$0x3]
    %v22 = vld [vmem:[%s1 + $0xa] sm:$0x3]
    %v23 = vld [vmem:[%s1 + $0xc] sm:$0x3]
    %v24 = vld [vmem:[%s1 + $0xe] sm:$0x3]
    %v25 = vld [vmem:[%s2] sm:$0xf]
    %v26 = vunpack.c.l.bf16 %v17
    %v27 = vperm.slane %v15, 0
    %v28 = vperm.slane %v16, 0
    %v29 = vmul.f32 %v27, %v26
    %v30 = vmul.f32 %v28, %v26
    %v31 = vadd.f32 %v25, %v29
    %v32 = vadd.f32 %v25, %v30
    %v33 = vunpack.c.l.bf16 %v18
    %v34 = vperm.slane %v15, 1
    %v35 = vperm.slane %v16, 1
    %v36 = vmul.f32 %v34, %v33
    %v37 = vmul.f32 %v35, %v33
    %v38 = vadd.f32 %v31, %v36
    %v39 = vadd.f32 %v32, %v37
    %v40 = vunpack.c.l.bf16 %v19
    %v41 = vperm.slane %v15, 2
    %v42 = vperm.slane %v16, 2
    %v43 = vmul.f32 %v41, %v40
    %v44 = vmul.f32 %v42, %v40
    %v45 = vadd.f32 %v38, %v43
    %v46 = vadd.f32 %v39, %v44
    %v47 = vunpack.c.l.bf16 %v20
    %v48 = vperm.slane %v15, 3
    %v49 = vperm.slane %v16, 3
    %v50 = vmul.f32 %v48, %v47
    %v51 = vmul.f32 %v49, %v47
    %v52 = vadd.f32 %v45, %v50
    %v53 = vadd.f32 %v46, %v51
    %v54 = vunpack.c.l.bf16 %v21
    %v55 = vperm.slane %v15, 4
    %v56 = vperm.slane %v16, 4
    %v57 = vmul.f32 %v55, %v54
    %v58 = vmul.f32 %v56, %v54
    %v59 = vadd.f32 %v52, %v57
    %v60 = vadd.f32 %v53, %v58
    %v61 = vunpack.c.l.bf16 %v22
    %v62 = vperm.slane %v15, 5
    %v63 = vperm.slane %v16, 5
    %v64 = vmul.f32 %v62, %v61
    %v65 = vmul.f32 %v63, %v61
    %v66 = vadd.f32 %v59, %v64
    %v67 = vadd.f32 %v60, %v65
    %v68 = vunpack.c.l.bf16 %v23
    %v69 = vperm.slane %v15, 6
    %v70 = vperm.slane %v16, 6
    %v71 = vmul.f32 %v69, %v68
    %v72 = vmul.f32 %v70, %v68
    %v73 = vadd.f32 %v66, %v71
    %v74 = vadd.f32 %v67, %v72
    %v75 = vunpack.c.l.bf16 %v24
    %v76 = vperm.slane %v15, 7
    %v77 = vperm.slane %v16, 7
    %v78 = vmul.f32 %v76, %v75
    %v79 = vmul.f32 %v77, %v75
    %v80 = vadd.f32 %v73, %v78
    %v81 = vadd.f32 %v74, %v79
    %vm82 = vcmask 27648
    %83 = vst.msk [vmem:[#allocation2] sm:$0xf] %vm82, %v80
    %84 = vst.msk [vmem:[#allocation2 + $0x4] sm:$0xf] %vm82, %v81
    // Predicated region
    $region14: #{tpu_custom_call.1} parent=1 // pred_check
      _
    $region15: #{tpu_custom_call.1} parent=1 // pred_check_branch
      %86 = sbr.rel (0) target = $region17
    $region16: #{tpu_custom_call.1} parent=1 // pred_region
      %88 = vsyncadd [#allocation3], 0
      %s89 = sshll.u32 [#allocation2], 4
      %s90 = int_to_ptr.vmem [resolvable:$true] %s89
      %s91 = sshll.u32 %s3, 4
      %s92 = int_to_ptr.hbm [resolvable:$true] %s91
      %97 = dma.vmem_to_hbm [thread:$0]  %s90, 128, %s92, [#allocation3], 64, 64, 4
    $region17: #{tpu_custom_call.1} parent=1 // pred_fallthru
      _
    // Predicated region
    $region18: #{tpu_custom_call.1} parent=1 // pred_check
      _
    $region19: #{tpu_custom_call.1} parent=1 // pred_check_branch
      %99 = sbr.rel (0) target = $region21
    $region20: #{tpu_custom_call.1} parent=1 // pred_region
      %101 = dma.done [#allocation3], 128
    $region21: #{tpu_custom_call.1} parent=1 // pred_fallthru
      _
    %102 = vsyncpa [#allocation3], 1

</llo_original>
